<compile_context>
chip_gen: v5e
topology: v5e:2x2
jax: 0.10.0
libtpu: 0.0.40
codegen_flags: <defaults>
</compile_context>

<pallas_src>
import functools
import math

import jax
import jax.numpy as jnp
from jax.experimental import pallas as pl
from jax.experimental.pallas import tpu as pltpu


# ----------------------------- Pallas kernels ------------------------------

def _layernorm_kernel(x_ref, g_ref, b_ref, o_ref, *, eps):
    # x block: (1, S, H); gamma/beta: (1, H)
    x = x_ref[0]                                            # (S, H) f32
    mu = jnp.mean(x, axis=-1, keepdims=True)
    var = jnp.mean((x - mu) * (x - mu), axis=-1, keepdims=True)
    inv = jax.lax.rsqrt(var + eps)
    o_ref[0] = ((x - mu) * inv * g_ref[...] + b_ref[...]).astype(o_ref.dtype)


def layernorm_bsh(x, gamma, beta, eps=1e-12):
    B, S, H = x.shape
    kernel = functools.partial(_layernorm_kernel, eps=eps)
    return pl.pallas_call(
        kernel,
        out_shape=jax.ShapeDtypeStruct((B, S, H), jnp.float32),
        grid=(B,),
        in_specs=[
            pl.BlockSpec((1, S, H), lambda b: (b, 0, 0)),
            pl.BlockSpec((1, H), lambda b: (0, 0)),
            pl.BlockSpec((1, H), lambda b: (0, 0)),
        ],
        out_specs=pl.BlockSpec((1, S, H), lambda b: (b, 0, 0)),
        compiler_params=pltpu.CompilerParams(dimension_semantics=("parallel",)),
    )(x, gamma, beta)


def _encoder_layer_kernel(x_ref, m_ref,
                          wqkv_ref, bqkv_ref,
                          wo_ref, bo_ref,
                          ln1_g_ref, ln1_b_ref,
                          wff1_ref, bff1_ref,
                          wff2_ref, bff2_ref,
                          ln2_g_ref, ln2_b_ref,
                          o_ref, *, heads, head_dim, eps):
    """Whole transformer encoder layer for one batch element (block (1, S, H))."""
    x = x_ref[0]                                            # (S, H) f32
    m = m_ref[0]                                            # (1, S) f32 additive mask
    H = heads * head_dim
    scale = 1.0 / math.sqrt(head_dim)
    bf16 = jnp.bfloat16

    def ln(y, g_ref, b_ref):
        mu = jnp.mean(y, axis=-1, keepdims=True)
        var = jnp.mean((y - mu) * (y - mu), axis=-1, keepdims=True)
        return (y - mu) * jax.lax.rsqrt(var + eps) * g_ref[...] + b_ref[...]

    # ---- fused QKV projection: one (S,H) x (H,3H) matmul on the MXU (bf16 in, f32 acc)
    qkv = jnp.dot(x.astype(bf16), wqkv_ref[...],
                  preferred_element_type=jnp.float32) + bqkv_ref[...]     # (S, 3H)
    q = qkv[:, 0:H]
    k = qkv[:, H:2 * H]
    v = qkv[:, 2 * H:3 * H]

    # ---- per-head attention, heads split as static lane slices (no host transposes)
    ctx_heads = []
    for h in range(heads):
        sl = slice(h * head_dim, (h + 1) * head_dim)
        qh = q[:, sl]                                       # (S, D) f32
        kh = k[:, sl]
        vh = v[:, sl]
        s = jnp.dot(qh, kh.T, preferred_element_type=jnp.float32) * scale + m
        s_max = jnp.max(s, axis=-1, keepdims=True)
        p = jnp.exp(s - s_max)
        denom = jnp.sum(p, axis=-1, keepdims=True)
        p = p * pl.reciprocal(denom, approx=True)           # EUP reciprocal, frees VALU
        ctx_heads.append(jnp.dot(p, vh, preferred_element_type=jnp.float32))
    ctx = jnp.concatenate(ctx_heads, axis=-1)               # (S, H)

    # ---- output projection + residual + LayerNorm
    attn_out = jnp.dot(ctx.astype(bf16), wo_ref[...],
                       preferred_element_type=jnp.float32) + bo_ref[...]
    x1 = ln(x + attn_out, ln1_g_ref, ln1_b_ref)

    # ---- feed-forward + residual + LayerNorm (all fused, f32 epilogue math)
    ff = jnp.dot(x1.astype(bf16), wff1_ref[...],
                 preferred_element_type=jnp.float32) + bff1_ref[...]
    # BERT gelu (tanh approximation).
    # TODO(synk): exact erf-based GELU for bit parity with HF/pytorch_pretrained_bert BertModel.
    c = math.sqrt(2.0 / math.pi)
    ff = 0.5 * ff * (1.0 + jnp.tanh(c * (ff + 0.044715 * ff * ff * ff)))
    ff2 = jnp.dot(ff.astype(bf16), wff2_ref[...],
                  preferred_element_type=jnp.float32) + bff2_ref[...]
    x2 = ln(x1 + ff2, ln2_g_ref, ln2_b_ref)

    o_ref[0] = x2.astype(o_ref.dtype)


def encoder_layer(x, add_mask, p, *, heads, head_dim, eps=1e-12):
    # x: (B, S, H) f32; add_mask: (B, 1, S) f32 additive mask
    B, S, H = x.shape
    I = p["w_ff1"].shape[1]
    kernel = functools.partial(_encoder_layer_kernel,
                               heads=heads, head_dim=head_dim, eps=eps)
    rep = lambda b: (0, 0)   # weights replicated (stay resident) across the batch grid
    return pl.pallas_call(
        kernel,
        out_shape=jax.ShapeDtypeStruct((B, S, H), jnp.float32),
        grid=(B,),
        in_specs=[
            pl.BlockSpec((1, S, H), lambda b: (b, 0, 0)),      # x
            pl.BlockSpec((1, 1, S), lambda b: (b, 0, 0)),      # additive mask (per batch)
            pl.BlockSpec((H, 3 * H), rep),                     # wqkv (bf16)
            pl.BlockSpec((1, 3 * H), rep),                     # bqkv
            pl.BlockSpec((H, H), rep),                         # wo (bf16)
            pl.BlockSpec((1, H), rep),                         # bo
            pl.BlockSpec((1, H), rep),                         # ln1 gamma
            pl.BlockSpec((1, H), rep),                         # ln1 beta
            pl.BlockSpec((H, I), rep),                         # w_ff1 (bf16)
            pl.BlockSpec((1, I), rep),                         # b_ff1
            pl.BlockSpec((I, H), rep),                         # w_ff2 (bf16)
            pl.BlockSpec((1, H), rep),                         # b_ff2
            pl.BlockSpec((1, H), rep),                         # ln2 gamma
            pl.BlockSpec((1, H), rep),                         # ln2 beta
        ],
        out_specs=pl.BlockSpec((1, S, H), lambda b: (b, 0, 0)),
        compiler_params=pltpu.CompilerParams(dimension_semantics=("parallel",)),
    )(x, add_mask,
      p["wqkv"], p["bqkv"], p["wo"], p["bo"], p["ln1_g"], p["ln1_b"],
      p["w_ff1"], p["b_ff1"], p["w_ff2"], p["b_ff2"], p["ln2_g"], p["ln2_b"])


def _head_kernel(cls_ref, pw_ref, pb_ref, fw_ref, fb_ref, o_ref):
    # pooler: tanh(CLS @ Wp + bp); classifier: pooled @ Wfc_pad + bfc_pad
    bf16 = jnp.bfloat16
    pooled = jnp.tanh(jnp.dot(cls_ref[...].astype(bf16), pw_ref[...],
                              preferred_element_type=jnp.float32) + pb_ref[...])
    out = jnp.dot(pooled.astype(bf16), fw_ref[...],
                  preferred_element_type=jnp.float32) + fb_ref[...]
    o_ref[...] = out.astype(o_ref.dtype)


def pooler_and_fc(cls, pool_w, pool_b, fc_w_pad, fc_b_pad, num_classes):
    B, H = cls.shape
    Npad = fc_w_pad.shape[1]
    out = pl.pallas_call(
        _head_kernel,
        out_shape=jax.ShapeDtypeStruct((B, Npad), jnp.float32),
        in_specs=[
            pl.BlockSpec((B, H), lambda: (0, 0)),
            pl.BlockSpec((H, H), lambda: (0, 0)),
            pl.BlockSpec((1, H), lambda: (0, 0)),
            pl.BlockSpec((H, Npad), lambda: (0, 0)),
            pl.BlockSpec((1, Npad), lambda: (0, 0)),
        ],
        out_specs=pl.BlockSpec((B, Npad), lambda: (0, 0)),
    )(cls, pool_w, pool_b, fc_w_pad, fc_b_pad)
    return out[:, :num_classes]


# --------------------------- Model (tiny BERT) ------------------------------

class TinyBertClassifier:
    """Deterministic-parameter mini BERT + classification head.

    Mirrors: Model.forward -> pooled = bert(ids, attention_mask)[1]; out = fc(pooled).
    """

    def __init__(self, *, vocab_size=100, hidden=32, layers=2, heads=4,
                 intermediate=64, max_pos=64, type_vocab=2, num_classes=10,
                 seed=0):
        assert hidden % heads == 0
        self.hidden = hidden
        self.layers = layers
        self.heads = heads
        self.head_dim = hidden // heads
        self.intermediate = intermediate
        self.num_classes = num_classes

        f32, bf16 = jnp.float32, jnp.bfloat16
        key = jax.random.PRNGKey(seed)

        def nrm(k, shape, scale=0.02):
            return (scale * jax.random.normal(k, shape)).astype(f32)

        keys = iter(jax.random.split(key, 3 + layers * 7 + 2))

        self.tok_emb = nrm(next(keys), (vocab_size, hidden))
        self.pos_emb = nrm(next(keys), (max_pos, hidden))
        self.typ_emb = nrm(next(keys), (type_vocab, hidden))
        self.emb_ln_g = jnp.ones((1, hidden), f32)
        self.emb_ln_b = jnp.zeros((1, hidden), f32)

        self.layer_params = []
        for _ in range(layers):
            wq = nrm(next(keys), (hidden, hidden))
            wk = nrm(next(keys), (hidden, hidden))
            wv = nrm(next(keys), (hidden, hidden))
            p = {
                # fused QKV weight: (H, 3H), bf16 for the MXU
                "wqkv": jnp.concatenate([wq, wk, wv], axis=1).astype(bf16),
                "bqkv": jnp.zeros((1, 3 * hidden), f32),
                "wo": nrm(next(keys), (hidden, hidden)).astype(bf16),
                "bo": jnp.zeros((1, hidden), f32),
                "ln1_g": jnp.ones((1, hidden), f32),
                "ln1_b": jnp.zeros((1, hidden), f32),
                "w_ff1": nrm(next(keys), (hidden, intermediate)).astype(bf16),
                "b_ff1": jnp.zeros((1, intermediate), f32),
                "w_ff2": nrm(next(keys), (intermediate, hidden)).astype(bf16),
                "b_ff2": jnp.zeros((1, hidden), f32),
                "ln2_g": jnp.ones((1, hidden), f32),
                "ln2_b": jnp.zeros((1, hidden), f32),
            }
            next(keys)  # keep key budget stable / deterministic layout
            self.layer_params.append(p)

        self.pool_w = nrm(next(keys), (hidden, hidden)).astype(bf16)
        self.pool_b = jnp.zeros((1, hidden), f32)

        fc_w = nrm(next(keys), (hidden, num_classes))
        n_pad = ((num_classes + 127) // 128) * 128          # lane-dense fc output
        self.fc_w_pad = jnp.zeros((hidden, n_pad), f32).at[:, :num_classes].set(fc_w).astype(bf16)
        self.fc_b_pad = jnp.zeros((1, n_pad), f32)

    def __call__(self, token_ids, mask):
        # token_ids, mask: (B, S) int32
        B, S = token_ids.shape
        H, nH, Dh = self.hidden, self.heads, self.head_dim

        # ---- embeddings (gather = glue in plain JAX) ----
        tok = jnp.take(self.tok_emb, token_ids, axis=0)                 # (B, S, H)
        pos = self.pos_emb[:S][None, :, :]                              # (1, S, H)
        typ = self.typ_emb[0][None, None, :]                            # segment ids = 0
        x = (tok + pos + typ).astype(jnp.float32)                       # (B, S, H)
        x = layernorm_bsh(x, self.emb_ln_g, self.emb_ln_b)

        # additive attention mask, per batch (broadcast over heads happens in-kernel)
        add_mask = ((1.0 - mask.astype(jnp.float32)) * -10000.0)[:, None, :]   # (B, 1, S)

        # ---- transformer encoder: one fused Pallas kernel per layer ----
        for p in self.layer_params:
            x = encoder_layer(x, add_mask, p, heads=nH, head_dim=Dh)

        # ---- pooler (tanh(W @ CLS + b)) + classification head, fused ----
        cls = x[:, 0, :]                                                # (B, H)
        out = pooler_and_fc(cls, self.pool_w, self.pool_b,
                            self.fc_w_pad, self.fc_b_pad, self.num_classes)
        return out                                                      # (B, num_classes)


# ------------------------------- demo ---------------------------------------

if __name__ == "__main__":
    B, S = 2, 8
    VOCAB, NUM_CLASSES = 100, 10

    key = jax.random.PRNGKey(0)
    k_ids, _ = jax.random.split(key)
    token_ids = jax.random.randint(k_ids, (B, S), 1, VOCAB, dtype=jnp.int32)
    # first sequence fully valid, second padded after 5 tokens (mask like build_sequence)
    mask = jnp.array([[1] * S, [1] * 5 + [0] * (S - 5)], dtype=jnp.int32)
    token_ids = token_ids * mask  # pad ids -> 0, matching build_sequence

    model = TinyBertClassifier(vocab_size=VOCAB, hidden=32, layers=2, heads=4,
                               intermediate=64, num_classes=NUM_CLASSES, seed=0)

    logits = model(token_ids, mask)
    jax.block_until_ready(logits)
    assert logits.shape == (B, NUM_CLASSES)
    print("KERNEL_OK")
</pallas_src>

<mosaic_0001>
module attributes {stable_mosaic.version = 11 : i64} {
  func.func @_layernorm_kernel(%arg0: i32, %arg1: memref<1x8x32xf32, #tpu.memory_space<vmem>>, %arg2: memref<1x32xf32, #tpu.memory_space<vmem>>, %arg3: memref<1x32xf32, #tpu.memory_space<vmem>>, %arg4: memref<1x8x32xf32, #tpu.memory_space<vmem>>) attributes {dimension_semantics = [#tpu.dimension_semantics<parallel>], iteration_bounds = array<i64: 2>, scalar_prefetch = 0 : i64, scratch_operands = 0 : i64, tpu.core_type = #tpu.core_type<tc>, window_params = [{transform_indices = @transform_0, window_bounds = array<i64: 1, 8, 32>}, {pipeline_mode = #tpu.pipeline_mode<synchronous>, transform_indices = @transform_1, window_bounds = array<i64: 1, 32>}, {pipeline_mode = #tpu.pipeline_mode<synchronous>, transform_indices = @transform_2, window_bounds = array<i64: 1, 32>}, {transform_indices = @transform_3, window_bounds = array<i64: 1, 8, 32>}]} {
    %c0 = arith.constant 0 : index
    %c0_0 = arith.constant 0 : index
    %c0_1 = arith.constant 0 : index
    %0 = vector.load %arg1[%c0, %c0_0, %c0_1] : memref<1x8x32xf32, #tpu.memory_space<vmem>>, vector<1x8x32xf32>
    %1 = vector.shape_cast %0 : vector<1x8x32xf32> to vector<8x32xf32>
    %cst = arith.constant dense<0.000000e+00> : vector<8xf32>
    %2 = vector.multi_reduction <add>, %1, %cst [1] : vector<8x32xf32> to vector<8xf32>
    %3 = vector.shape_cast %2 : vector<8xf32> to vector<8x1xf32>
    %cst_2 = arith.constant 3.200000e+01 : f32
    %4 = vector.broadcast %cst_2 : f32 to vector<8x1xf32>
    %5 = arith.divf %3, %4 : vector<8x1xf32>
    %6 = vector.broadcast %5 : vector<8x1xf32> to vector<8x32xf32>
    %7 = arith.subf %1, %6 : vector<8x32xf32>
    %8 = vector.broadcast %5 : vector<8x1xf32> to vector<8x32xf32>
    %9 = arith.subf %1, %8 : vector<8x32xf32>
    %10 = arith.mulf %7, %9 : vector<8x32xf32>
    %cst_3 = arith.constant dense<0.000000e+00> : vector<8xf32>
    %11 = vector.multi_reduction <add>, %10, %cst_3 [1] : vector<8x32xf32> to vector<8xf32>
    %12 = vector.shape_cast %11 : vector<8xf32> to vector<8x1xf32>
    %cst_4 = arith.constant 3.200000e+01 : f32
    %13 = vector.broadcast %cst_4 : f32 to vector<8x1xf32>
    %14 = arith.divf %12, %13 : vector<8x1xf32>
    %cst_5 = arith.constant 9.99999996E-13 : f32
    %15 = vector.broadcast %cst_5 : f32 to vector<8x1xf32>
    %16 = arith.addf %14, %15 : vector<8x1xf32>
    %17 = math.rsqrt %16 : vector<8x1xf32>
    %18 = vector.broadcast %5 : vector<8x1xf32> to vector<8x32xf32>
    %19 = arith.subf %1, %18 : vector<8x32xf32>
    %20 = vector.broadcast %17 : vector<8x1xf32> to vector<8x32xf32>
    %21 = arith.mulf %19, %20 : vector<8x32xf32>
    %c0_6 = arith.constant 0 : index
    %c0_7 = arith.constant 0 : index
    %22 = vector.load %arg2[%c0_6, %c0_7] : memref<1x32xf32, #tpu.memory_space<vmem>>, vector<1x32xf32>
    %23 = vector.broadcast %22 : vector<1x32xf32> to vector<8x32xf32>
    %24 = arith.mulf %21, %23 : vector<8x32xf32>
    %c0_8 = arith.constant 0 : index
    %c0_9 = arith.constant 0 : index
    %25 = vector.load %arg3[%c0_8, %c0_9] : memref<1x32xf32, #tpu.memory_space<vmem>>, vector<1x32xf32>
    %26 = vector.broadcast %25 : vector<1x32xf32> to vector<8x32xf32>
    %27 = arith.addf %24, %26 : vector<8x32xf32>
    %c0_10 = arith.constant 0 : index
    %c0_11 = arith.constant 0 : index
    %c0_12 = arith.constant 0 : index
    %28 = vector.load %arg4[%c0_10, %c0_11, %c0_12] : memref<1x8x32xf32, #tpu.memory_space<vmem>>, vector<1x8x32xf32>
    %29 = vector.shape_cast %28 : vector<1x8x32xf32> to vector<8x32xf32>
    %30 = vector.shape_cast %27 : vector<8x32xf32> to vector<1x8x32xf32>
    tpu.vector_store %arg4[%c0_10, %c0_11, %c0_12], %30 {strides = array<i32>} : memref<1x8x32xf32, #tpu.memory_space<vmem>>, vector<1x8x32xf32>,
    return
  }
  func.func @transform_0(%arg0: i32) -> (i32, i32, i32) {
    %c0_i32 = arith.constant 0 : i32
    %c0_i32_0 = arith.constant 0 : i32
    %c0_i32_1 = arith.constant 0 : i32
    return %arg0, %c0_i32, %c0_i32_0 : i32, i32, i32
  }
  func.func @transform_1(%arg0: i32) -> (i32, i32) {
    %c0_i32 = arith.constant 0 : i32
    %c0_i32_0 = arith.constant 0 : i32
    %c0_i32_1 = arith.constant 0 : i32
    return %c0_i32, %c0_i32_0 : i32, i32
  }
  func.func @transform_2(%arg0: i32) -> (i32, i32) {
    %c0_i32 = arith.constant 0 : i32
    %c0_i32_0 = arith.constant 0 : i32
    %c0_i32_1 = arith.constant 0 : i32
    return %c0_i32, %c0_i32_0 : i32, i32
  }
  func.func @transform_3(%arg0: i32) -> (i32, i32, i32) {
    %c0_i32 = arith.constant 0 : i32
    %c0_i32_0 = arith.constant 0 : i32
    %c0_i32_1 = arith.constant 0 : i32
    return %arg0, %c0_i32, %c0_i32_0 : i32, i32, i32
  }
}

</mosaic_0001>

<llo_original>
// kernel: tpu_custom_call.1
$region0: #{tpu_custom_call.1}
  #allocation0 [shape = 'u32[]', space=smem, size = 0x4, offset = 0x4, fixed_abs, tag = 'smem constant byte address 0x4 - core index']
  #allocation1 [shape = 'u32[72,128]{1,0:T(1,128)}', space=vmem, size = 0x9000, scoped, tag = 'internal scratch']
  %s0 = inlined_call_operand.hbm [shape: f32[2,8,32], index: 0, kind: input, shape index: {}]
  %s1 = inlined_call_operand.hbm [shape: f32[1,32], index: 1, kind: input, shape index: {}]
  %s2 = inlined_call_operand.vmem [shape: f32[1,32], index: 2, kind: input, shape index: {}]
  %s3 = inlined_call_operand.hbm [shape: f32[2,8,32], index: 3, kind: output, shape index: {}]
  %s4 = sld [smem:[#allocation0]]
  $region53: #{tpu_custom_call.1} parent=0
    _
  %s6 = ssub.s32 1, %s4
  %s7 = scalar_select 0, %s6, %s4
  $region1: #{tpu_custom_call.1} parent=0
    #allocation2 [shape = 'u8[8192]{0}', space=vmem, size = 0x2000, scoped, tag = 'input window, operand 0']
    #allocation3 [shape = 's32[2]{0}', space=sflag, size = 0x8, scoped, tag = 'scoped memory for tpu_custom_call.1']
    #allocation4 [shape = 's32[2]{0}', space=sflag, size = 0x8, scoped, tag = 'scoped memory for tpu_custom_call.1']
    #allocation5 [shape = 'u8[512]{0}', space=vmem, size = 0x400, scoped, tag = 'input window, operand 1, single buffered']
    #allocation6 [shape = 's32[1]{0}', space=sflag, size = 0x4, scoped, tag = 'scoped memory for tpu_custom_call.1']
    #allocation7 [shape = 'u8[8192]{0}', space=vmem, size = 0x2000, scoped, tag = 'output window, operand 0']
    %8 = vsyncpa [#allocation3], 0
    %s9 = scalar_lea.sflag [#allocation3], 1
    %10 = vsyncpa %s9, 0
    %11 = vsyncpa [#allocation6], 0
    %12 = vsyncpa [#allocation4], 0
    %s13 = scalar_lea.sflag [#allocation4], 1
    %14 = vsyncpa %s13, 0
    loop: start=0, step=1, limit=4
    $region2: #{tpu_custom_call.1} parent=1 // loop_pre_header
      _
    $region3: #{tpu_custom_call.1} parent=1 // loop_header
      %s16 = sphi 0, %s20
      %p17 = scmp.ge.s32.totalorder %s16, 4
      %s26 = sphi 0, %s28
      %s29 = sphi 0, %s26
      %s30 = sphi 0, %s29
      %s46 = sphi 0, %s30
      %s50 = sphi 0, %s50
      %s52 = sphi 0, %s50
      %s53 = sphi 0, %s52
      %s67 = sphi 0, %s53
      %s71 = sphi 0, %s71
      %s73 = sphi 0, %s71
      %s74 = sphi 0, %s73
      %s88 = sphi 0, %s74
      %s94 = sphi 0, %s96
      %s97 = sphi 0, %s94
      %s98 = sphi 0, %s97
      %s114 = sphi 0, %s98
    $region4: #{tpu_custom_call.1} parent=1 // loop_header_branch
      %19 = sbr.rel (%p17) target = $region8
    $region5: #{tpu_custom_call.1} parent=1 // loop_body
      %s21 = ssub.s32 %s16, 1
      %s22 = ssub.s32 %s16, 2
      %s23 = sadd.s32 %s16, 1
      %s24 = ssub.s32 %s16, %s23
      %p25 = scmp.eq.s32.totalorder %s24, 0
      %s27 = sadd.s32 %s26, 1
      %s28 = scalar_select %p25, %s26, %s27
      %p31 = pneg %p25
      %p32 = scmp.eq.s32.totalorder %s16, 1
      %p33 = por %p31, %p32
      %p34 = scmp.ne.s32.totalorder %s26, %s29
      %p35 = scmp.eq.s32.totalorder %s16, 0
      %p36 = por %p34, %p35
      %p37 = scmp.ne.s32.totalorder %s26, %s29
      %p38 = scmp.eq.s32.totalorder %s21, 1
      %p39 = por %p37, %p38
      %p40 = scmp.ne.s32.totalorder %s29, %s30
      %p41 = scmp.eq.s32.totalorder %s21, 0
      %p42 = por %p40, %p41
      %p43 = scmp.ne.s32.totalorder %s29, %s30
      %p44 = scmp.eq.s32.totalorder %s22, 1
      %p45 = por %p43, %p44
      %p47 = scmp.ne.s32.totalorder %s30, %s46
      %p48 = scmp.eq.s32.totalorder %s22, 0
      %p49 = por %p47, %p48
      %s51 = sadd.s32 %s50, 1
      %p54 = scmp.eq.s32.totalorder %s16, 1
      %p55 = scmp.ne.s32.totalorder %s50, %s52
      %p56 = scmp.eq.s32.totalorder %s16, 0
      %p57 = por %p55, %p56
      %p58 = scmp.ne.s32.totalorder %s50, %s52
      %p59 = scmp.eq.s32.totalorder %s21, 1
      %p60 = por %p58, %p59
      %p61 = scmp.ne.s32.totalorder %s52, %s53
      %p62 = scmp.eq.s32.totalorder %s21, 0
      %p63 = por %p61, %p62
      %p64 = scmp.ne.s32.totalorder %s52, %s53
      %p65 = scmp.eq.s32.totalorder %s22, 1
      %p66 = por %p64, %p65
      %p68 = scmp.ne.s32.totalorder %s53, %s67
      %p69 = scmp.eq.s32.totalorder %s22, 0
      %p70 = por %p68, %p69
      %s72 = sadd.s32 %s71, 1
      %p75 = scmp.eq.s32.totalorder %s16, 1
      %p76 = scmp.ne.s32.totalorder %s71, %s73
      %p77 = scmp.eq.s32.totalorder %s16, 0
      %p78 = por %p76, %p77
      %p79 = scmp.ne.s32.totalorder %s71, %s73
      %p80 = scmp.eq.s32.totalorder %s21, 1
      %p81 = por %p79, %p80
      %p82 = scmp.ne.s32.totalorder %s73, %s74
      %p83 = scmp.eq.s32.totalorder %s21, 0
      %p84 = por %p82, %p83
      %p85 = scmp.ne.s32.totalorder %s73, %s74
      %p86 = scmp.eq.s32.totalorder %s22, 1
      %p87 = por %p85, %p86
      %p89 = scmp.ne.s32.totalorder %s74, %s88
      %p90 = scmp.eq.s32.totalorder %s22, 0
      %p91 = por %p89, %p90
      %s92 = ssub.s32 %s16, %s23
      %p93 = scmp.eq.s32.totalorder %s92, 0
      %s95 = sadd.s32 %s94, 1
      %s96 = scalar_select %p93, %s94, %s95
      %p99 = pneg %p93
      %p100 = scmp.eq.s32.totalorder %s16, 1
      %p101 = por %p99, %p100
      %p102 = scmp.ne.s32.totalorder %s94, %s97
      %p103 = scmp.eq.s32.totalorder %s16, 0
      %p104 = por %p102, %p103
      %p105 = scmp.ne.s32.totalorder %s94, %s97
      %p106 = scmp.eq.s32.totalorder %s21, 1
      %p107 = por %p105, %p106
      %p108 = scmp.ne.s32.totalorder %s97, %s98
      %p109 = scmp.eq.s32.totalorder %s21, 0
      %p110 = por %p108, %p109
      %p111 = scmp.ne.s32.totalorder %s97, %s98
      %p112 = scmp.eq.s32.totalorder %s22, 1
      %p113 = por %p111, %p112
      %p115 = scmp.ne.s32.totalorder %s98, %s114
      %p116 = scmp.eq.s32.totalorder %s22, 0
      %p117 = por %p115, %p116
      %p118 = scmp.le.s32.totalorder 1, %s16
      %p119 = scmp.lt.s32.totalorder %s16, 3
      %p120 = pnand %p118, %p119
      %p121 = pneg %p120
      // Predicated region
      $region9: #{tpu_custom_call.1} parent=5 // pred_check
        _
      $region10: #{tpu_custom_call.1} parent=5 // pred_check_branch
        %123 = sbr.rel (%p120) target = $region12
      $region11: #{tpu_custom_call.1} parent=5 // pred_region
        %s124 = ssub.s32 %s16, 1
        // Predicated region
        $region13: #{tpu_custom_call.1} parent=11 // pred_check
          %p125 = pneg %p63
        $region14: #{tpu_custom_call.1} parent=11 // pred_check_branch
          %127 = sbr.rel (%p125) target = $region16
        $region15: #{tpu_custom_call.1} parent=11 // pred_region
          %129 = vsyncadd [#allocation6], 0
          %s131 = sshll.u32 %s1, 4
          %s132 = int_to_ptr.hbm [resolvable:$true] %s131
          %s133 = sshll.u32 [#allocation5], 4
          %s134 = int_to_ptr.vmem [resolvable:$true] %s133
          %136 = dma.hbm_to_vmem [thread:$0]  %s132, 16, %s134, [#allocation6]
        $region16: #{tpu_custom_call.1} parent=11 // pred_fallthru
          _
        // Predicated region
        $region17: #{tpu_custom_call.1} parent=11 // pred_check
          %p137 = pneg %p84
        $region18: #{tpu_custom_call.1} parent=11 // pred_check_branch
          %139 = sbr.rel (%p137) target = $region20
        $region19: #{tpu_custom_call.1} parent=11 // pred_region
          _
        $region20: #{tpu_custom_call.1} parent=11 // pred_fallthru
          _
      $region12: #{tpu_custom_call.1} parent=5 // pred_fallthru
        _
      %p140 = scmp.lt.s32.totalorder %s16, 2
      // Predicated region
      $region21: #{tpu_custom_call.1} parent=5 // pred_check
        %p141 = pneg %p140
      $region22: #{tpu_custom_call.1} parent=5 // pred_check_branch
        %143 = sbr.rel (%p141) target = $region24
      $region23: #{tpu_custom_call.1} parent=5 // pred_region
        // Predicated region
        $region25: #{tpu_custom_call.1} parent=23 // pred_check
          %p144 = pneg %p36
        $region26: #{tpu_custom_call.1} parent=23 // pred_check_branch
          %146 = sbr.rel (%p144) target = $region28
        $region27: #{tpu_custom_call.1} parent=23 // pred_region
          %s147 = sand.u32 %s26, 1
          %s148 = scalar_lea.sflag [#allocation3], %s147
          %s149 = sand.u32 %s26, 1
          %s150 = smul.addr %s149, 8
          %s151 = scalar_lea.vmem [#allocation2], %s150
          %153 = vsyncadd %s148, 0
          %s154 = smul.addr %s16, 8
          %s155 = scalar_lea.hbm %s0, %s154
          %s157 = sshll.u32 %s155, 4
          %s158 = int_to_ptr.hbm [resolvable:$true] %s157
          %s159 = sshll.u32 %s151, 4
          %s160 = int_to_ptr.vmem [resolvable:$true] %s159
          %162 = dma.hbm_to_vmem [thread:$0]  %s158, 128, %s160, %s148
        $region28: #{tpu_custom_call.1} parent=23 // pred_fallthru
          _
      $region24: #{tpu_custom_call.1} parent=5 // pred_fallthru
        _
      %p163 = scmp.le.s32.totalorder 1, %s16
      %p164 = scmp.lt.s32.totalorder %s16, 3
      %p165 = pnand %p163, %p164
      %p166 = pneg %p165
      // Predicated region
      $region29: #{tpu_custom_call.1} parent=5 // pred_check
        _
      $region30: #{tpu_custom_call.1} parent=5 // pred_check_branch
        %168 = sbr.rel (%p165) target = $region32
      $region31: #{tpu_custom_call.1} parent=5 // pred_region
        %s169 = ssub.s32 %s16, 1
        %s170 = sand.u32 %s29, 1
        %s171 = scalar_lea.sflag [#allocation3], %s170
        %s172 = sand.u32 %s29, 1
        %s173 = smul.addr %s172, 8
        %s174 = scalar_lea.vmem [#allocation2], %s173
        // Predicated region
        $region33: #{tpu_custom_call.1} parent=31 // pred_check
          %p175 = pneg %p42
        $region34: #{tpu_custom_call.1} parent=31 // pred_check_branch
          %177 = sbr.rel (%p175) target = $region36
        $region35: #{tpu_custom_call.1} parent=31 // pred_region
          %179 = dma.done %s171, 128
        $region36: #{tpu_custom_call.1} parent=31 // pred_fallthru
          _
        // Predicated region
        $region37: #{tpu_custom_call.1} parent=31 // pred_check
          %p180 = pneg %p63
        $region38: #{tpu_custom_call.1} parent=31 // pred_check_branch
          %182 = sbr.rel (%p180) target = $region40
        $region39: #{tpu_custom_call.1} parent=31 // pred_region
          %184 = dma.done [#allocation6], 16
        $region40: #{tpu_custom_call.1} parent=31 // pred_fallthru
          _
        %s185 = sand.u32 %s29, 1
        %s186 = scalar_lea.sflag [#allocation3], %s185
        %s187 = sand.u32 %s29, 1
        %s188 = smul.addr %s187, 8
        %s189 = scalar_lea.vmem [#allocation2], %s188
        %p190 = pneg %p42
        %p191 = pneg %p39
        %p192 = pneg %p63
        %p193 = pneg %p60
        %p194 = pneg %p84
        %p195 = pneg %p81
        %p196 = pneg %p110
        %p197 = pneg %p107
        %s198 = sand.u32 %s97, 1
        %s199 = scalar_lea.sflag [#allocation4], %s198
        %s200 = sand.u32 %s97, 1
        %s201 = smul.addr %s200, 8
        %s202 = scalar_lea.vmem [#allocation7], %s201
        %v203 = vld [vmem:[%s174] sm:$0xff]
        %vm204 = vcmask 261120
        %v205 = vsel %vm204, %v203, 0.0
        %206 = vadd.xlane.f32.xlu0 %v205
        %v207 = vpop.xlane.xlu0 %206
        %v208 = vrcp.pop 32.0
        %v209 = vmul.f32 32.0, %v208
        %v210 = vsub.f32 1.0, %v209
        %v211 = vmul.f32 %v208, %v210
        %v212 = vadd.f32 %v208, %v211
        %vm213 = vweird.f32 %v208
        %v214 = vsel %vm213, %v208, %v212
        %v215 = vmul.f32 %v207, %v214
        %v216 = vsub.f32 %v203, %v215
        %v217 = vmul.f32 %v216, %v216
        %v218 = vsel %vm204, %v217, 0.0
        %219 = vadd.xlane.f32.xlu0 %v218
        %v220 = vpop.xlane.xlu0 %219
        %v221 = vmul.f32 %v220, %v214
        %v222 = vadd.f32 %v221, 1e-12
        %v223 = vrsqrt.pop %v222
        %v224 = vmul.f32 %v223, %v222
        %v225 = vmul.f32 %v224, %v223
        %v226 = vmul.f32 0.5, %v225
        %v227 = vsub.f32 1.5, %v226
        %v228 = vmul.f32 %v223, %v227
        %vm229 = vweird.f32 %v222
        %vm230 = vweird.f32 %v223
        %vm231 = vmor %vm229, %vm230
        %v232 = vsel %vm231, %v223, %v228
        %v233 = vmul.f32 %v216, %v232
        %v234 = vld [vmem:[#allocation5] sm:$0x1]
        %v236 = vperm.slane %v234, 0
        %v238 = vmul.f32 %v233, %v236
        %v239 = vld [vmem:[%s2] sm:$0x1]
        %v241 = vperm.slane %v239, 0
        %v243 = vadd.f32 %v238, %v241
        %244 = vst.msk [vmem:[%s202] sm:$0xff] %vm204, %v243
        %s245 = sand.u32 %s97, 1
        %s246 = scalar_lea.sflag [#allocation4], %s245
        %s247 = sand.u32 %s97, 1
        %s248 = smul.addr %s247, 8
        %s249 = scalar_lea.vmem [#allocation7], %s248
        // Predicated region
        $region41: #{tpu_custom_call.1} parent=31 // pred_check
          %p250 = pneg %p107
        $region42: #{tpu_custom_call.1} parent=31 // pred_check_branch
          %252 = sbr.rel (%p250) target = $region44
        $region43: #{tpu_custom_call.1} parent=31 // pred_region
          %254 = vsyncadd %s246, 0
          %s255 = smul.addr %s21, 8
          %s256 = scalar_lea.hbm %s3, %s255
          %s258 = sshll.u32 %s249, 4
          %s259 = int_to_ptr.vmem [resolvable:$true] %s258
          %s260 = sshll.u32 %s256, 4
          %s261 = int_to_ptr.hbm [resolvable:$true] %s260
          %263 = dma.vmem_to_hbm [thread:$0]  %s259, 128, %s261, %s246
        $region44: #{tpu_custom_call.1} parent=31 // pred_fallthru
          _
      $region32: #{tpu_custom_call.1} parent=5 // pred_fallthru
        _
      %p264 = scmp.le.s32.totalorder 2, %s16
      // Predicated region
      $region45: #{tpu_custom_call.1} parent=5 // pred_check
        %p265 = pneg %p264
      $region46: #{tpu_custom_call.1} parent=5 // pred_check_branch
        %267 = sbr.rel (%p265) target = $region48
      $region47: #{tpu_custom_call.1} parent=5 // pred_region
        %s268 = ssub.s32 %s16, 2
        // Predicated region
        $region49: #{tpu_custom_call.1} parent=47 // pred_check
          %p269 = pneg %p113
        $region50: #{tpu_custom_call.1} parent=47 // pred_check_branch
          %271 = sbr.rel (%p269) target = $region52
        $region51: #{tpu_custom_call.1} parent=47 // pred_region
          %s272 = sand.u32 %s98, 1
          %s273 = scalar_lea.sflag [#allocation4], %s272
          %s274 = sand.u32 %s98, 1
          %s275 = smul.addr %s274, 8
          %s276 = scalar_lea.vmem [#allocation7], %s275
          %278 = dma.done %s273, 128
        $region52: #{tpu_custom_call.1} parent=47 // pred_fallthru
          _
      $region48: #{tpu_custom_call.1} parent=5 // pred_fallthru
        _
    $region6: #{tpu_custom_call.1} parent=1 // loop_footer
      %s20 = sadd.s32 1, %s16
    $region7: #{tpu_custom_call.1} parent=1 // loop_footer_branch
      %15 = sbr.rel target = $region3
    $region8: #{tpu_custom_call.1} parent=1 // loop_exit
      _
    %279 = vsyncpa [#allocation3], 1
    %s280 = scalar_lea.sflag [#allocation3], 1
    %281 = vsyncpa %s280, 1
    %282 = vsyncpa [#allocation6], 1
    %283 = vsyncpa [#allocation4], 1
    %s284 = scalar_lea.sflag [#allocation4], 1
    %285 = vsyncpa %s284, 1

</llo_original>
